<compile_context>
chip_gen: v6e
topology: v6e:2x2x1
jax: 0.10.0
libtpu: 0.0.40
codegen_flags: <defaults>
</compile_context>

<pallas_src>
import jax
import jax.numpy as jnp
from jax import lax
from jax.experimental import pallas as pl
from jax.experimental.pallas import tpu as pltpu

NUM_LABELS = 8
NUM_METRICS = 10
HIDDEN = 32
OUT = NUM_LABELS + 2 + NUM_METRICS  # fused head width = 20
LANES = 128                         # lane-dense slab / aux width

CLS_W = 0.4
ANOM_W = 0.3
METR_W = 0.3


def _round_up(x, m):
    return ((x + m - 1) // m) * m


def _make_kernel(batch, tile_b):
    neg_inf = float("-inf")

    def kernel(pooled_ref,   # [TB, H]     bf16
               w_ref,        # [H, 128]    bf16  (cls|anom|metrics, zero-padded)
               b_ref,        # [1, 128]    f32
               aux_ref,      # [TB, 128]   f32   (onehot lbl|onehot anom|metrics|0)
               slab_ref,     # [TB, 128]   f32   lane-dense logits slab
               part_ref):    # [1, 8, 128] f32   per-block partial loss sums
        i = pl.program_id(0)

        # Single fused MXU pass for all three heads; f32 accumulate, one bias add.
        logits = jnp.dot(pooled_ref[...], w_ref[...],
                         preferred_element_type=jnp.float32) + b_ref[...]
        slab_ref[...] = logits                                   # full-width store

        aux = aux_ref[...]
        lane = lax.broadcasted_iota(jnp.int32, (tile_b, LANES), 1)
        row = i * tile_b + lax.broadcasted_iota(jnp.int32, (tile_b, 1), 0)
        valid = row < batch                                      # [TB,1] bool

        cls_mask = lane < NUM_LABELS
        anom_mask = (lane >= NUM_LABELS) & (lane < NUM_LABELS + 2)
        metr_mask = (lane >= NUM_LABELS + 2) & (lane < OUT)

        def masked_ce(mask):
            # Stable log-softmax restricted to this head's lanes, full-width math.
            masked = jnp.where(mask, logits, neg_inf)
            m = jnp.max(masked, axis=-1, keepdims=True)
            lse = m + jnp.log(jnp.sum(jnp.exp(masked - m), axis=-1, keepdims=True))
            picked = jnp.sum(jnp.where(mask, logits * aux, 0.0),
                             axis=-1, keepdims=True)             # one-hot pick
            return jnp.where(valid, lse - picked, 0.0)           # [TB,1]

        ce_cls = masked_ce(cls_mask)
        ce_anom = masked_ce(anom_mask)

        # MSE: per-lane partial sums (lane reduce deferred to the wrapper).
        diff = logits - aux
        sq = jnp.where(valid & metr_mask, diff * diff, 0.0)      # [TB,128]

        cls_sum = jnp.sum(ce_cls, axis=0, keepdims=True)         # [1,1]
        anom_sum = jnp.sum(ce_anom, axis=0, keepdims=True)       # [1,1]
        sq_lanes = jnp.sum(sq, axis=0, keepdims=True)            # [1,128]

        lane_row = lax.broadcasted_iota(jnp.int32, (1, LANES), 1)
        part_row = jnp.where(lane_row == 0, cls_sum,
                             jnp.where(lane_row == 1, anom_sum, sq_lanes))
        part_ref[...] = jnp.broadcast_to(part_row.reshape(1, 1, LANES),
                                         (1, 8, LANES))

    return kernel


def monitoring_model_forward(pooled, params, labels, anomalies, metrics,
                             *, block_rows=2048):
    """pooled: [B, H] f32. Returns dict matching the PyTorch module's outputs."""
    B, H = pooled.shape

    # Fuse the three nn.Linear heads ([out,in] -> [in,out]) and zero-pad to a
    # lane-dense 128-wide head so the slab store is a full-width vst.
    w_cat = jnp.concatenate(
        [params["classifier_w"].T, params["anomaly_w"].T, params["metrics_w"].T],
        axis=1)                                                          # [H, 20]
    w_pad = jnp.pad(w_cat, ((0, 0), (0, LANES - OUT))).astype(jnp.bfloat16)
    b_cat = jnp.concatenate(
        [params["classifier_b"], params["anomaly_b"], params["metrics_b"]])
    b_pad = jnp.pad(b_cat, (0, LANES - OUT)).reshape(1, LANES).astype(jnp.float32)

    # Batch tile: large (amortizes ~0.35us per-step overhead), but split so that
    # nb >= 2 when the batch allows it -> both v7x TensorCores get a block.
    # Harmless on single-TC v5e/v6e.
    TB = min(block_rows, _round_up(max((B + 1) // 2, 1), 8))
    B_pad = _round_up(B, TB)
    nb = B_pad // TB

    # One lane-dense aux input carrying every per-row loss target, laid out to
    # match the slab lanes: [one-hot labels | one-hot anomalies | metrics | 0].
    aux = jnp.concatenate(
        [jax.nn.one_hot(labels, NUM_LABELS, dtype=jnp.float32),
         jax.nn.one_hot(anomalies, 2, dtype=jnp.float32),
         metrics.astype(jnp.float32)], axis=1)                           # [B, 20]
    aux_p = jnp.pad(aux, ((0, B_pad - B), (0, LANES - OUT)))             # [B_pad,128]

    # TODO(synk): in a real pipeline produce pooled in bf16 upstream (and for
    # tiny batches fuse the encoder + CLS pooling into this kernel).
    pooled_p = jnp.pad(pooled.astype(jnp.bfloat16), ((0, B_pad - B), (0, 0)))

    slab, partials = pl.pallas_call(
        _make_kernel(B, TB),
        out_shape=(
            jax.ShapeDtypeStruct((B_pad, LANES), jnp.float32),    # logits slab
            jax.ShapeDtypeStruct((nb, 8, LANES), jnp.float32),    # partial sums
        ),
        grid=(nb,),
        in_specs=[
            pl.BlockSpec((TB, H), lambda i: (i, 0)),              # pooled (stream)
            pl.BlockSpec((H, LANES), lambda i: (0, 0)),           # fused W (resident)
            pl.BlockSpec((1, LANES), lambda i: (0, 0)),           # fused b (resident)
            pl.BlockSpec((TB, LANES), lambda i: (i, 0)),          # aux targets (stream)
        ],
        out_specs=(
            pl.BlockSpec((TB, LANES), lambda i: (i, 0)),
            pl.BlockSpec((1, 8, LANES), lambda i: (i, 0, 0)),
        ),
        compiler_params=pltpu.CompilerParams(
            dimension_semantics=("parallel",)),                   # batch axis shardable
    )(pooled_p, w_pad, b_pad, aux_p)

    # Tiny final reduction of the per-block partials (kept in the wrapper so the
    # batch grid axis stays "parallel"); means via a single divide by true B.
    psum = jnp.sum(partials[:, 0, :], axis=0)                     # [128]
    loss = (CLS_W * psum[0] / B
            + ANOM_W * psum[1] / B
            + METR_W * jnp.sum(psum[NUM_LABELS + 2:OUT]) / (B * NUM_METRICS))

    return {
        "loss": loss,
        "classification_logits": slab[:B, 0:NUM_LABELS],
        "anomaly_logits": slab[:B, NUM_LABELS:NUM_LABELS + 2],
        "metrics_predictions": slab[:B, NUM_LABELS + 2:OUT],
    }


def synthetic_base_model(input_ids, attention_mask, embed_table):
    """Synthetic stand-in for base_model: embedding lookup + mask (plain JAX glue)."""
    hidden = embed_table[input_ids]                               # [B, S, H]
    hidden = hidden * attention_mask[..., None].astype(hidden.dtype)
    return hidden  # "last_hidden_state"


if __name__ == "__main__":
    B, S, V = 2, 8, 50
    key = jax.random.PRNGKey(0)
    k_emb, k_wc, k_wa, k_wm, k_ids, k_metrics = jax.random.split(key, 6)

    # Deterministic parameter init (PyTorch: normal(0, 0.02), zero bias).
    params = {
        "classifier_w": 0.02 * jax.random.normal(k_wc, (NUM_LABELS, HIDDEN), jnp.float32),
        "classifier_b": jnp.zeros((NUM_LABELS,), jnp.float32),
        "anomaly_w": 0.02 * jax.random.normal(k_wa, (2, HIDDEN), jnp.float32),
        "anomaly_b": jnp.zeros((2,), jnp.float32),
        "metrics_w": 0.02 * jax.random.normal(k_wm, (NUM_METRICS, HIDDEN), jnp.float32),
        "metrics_b": jnp.zeros((NUM_METRICS,), jnp.float32),
    }
    embed_table = 0.02 * jax.random.normal(k_emb, (V, HIDDEN), jnp.float32)

    input_ids = jax.random.randint(k_ids, (B, S), 0, V)
    attention_mask = jnp.ones((B, S), jnp.int32)
    labels = jnp.array([1, 5], jnp.int32)
    anomalies = jnp.array([0, 1], jnp.int32)
    metrics = jax.random.normal(k_metrics, (B, NUM_METRICS), jnp.float32)

    last_hidden_state = synthetic_base_model(input_ids, attention_mask, embed_table)
    pooled = last_hidden_state[:, 0]  # CLS token, [B, H]

    # jit the wrapper so the prologue glue (casts / pads / one-hots) fuses into a
    # couple of XLA ops around the kernel (tiny-batch path is launch-bound).
    fwd = jax.jit(monitoring_model_forward)
    out = fwd(pooled, params, labels, anomalies, metrics)
    jax.block_until_ready(out)

    # Reference in plain JAX (mirrors the kernel's bf16 input rounding; the MXU
    # accumulates in f32, so logits match f32 math on the rounded inputs).
    def ref_forward(pooled, params, labels, anomalies, metrics):
        x = pooled.astype(jnp.bfloat16).astype(jnp.float32)

        def head(w, b):
            wt = w.astype(jnp.bfloat16).astype(jnp.float32)
            return x @ wt.T + b

        cls = head(params["classifier_w"], params["classifier_b"])
        an = head(params["anomaly_w"], params["anomaly_b"])
        mp = head(params["metrics_w"], params["metrics_b"])

        def ce(lg, t):
            ls = jax.nn.log_softmax(lg, axis=-1)
            return -jnp.mean(jnp.take_along_axis(ls, t[:, None], axis=-1))

        loss = (CLS_W * ce(cls, labels) + ANOM_W * ce(an, anomalies)
                + METR_W * jnp.mean((mp - metrics) ** 2))
        return cls, an, mp, loss

    r_cls, r_an, r_mp, r_loss = ref_forward(pooled, params, labels, anomalies, metrics)
    assert jnp.allclose(out["classification_logits"], r_cls, atol=1e-5)
    assert jnp.allclose(out["anomaly_logits"], r_an, atol=1e-5)
    assert jnp.allclose(out["metrics_predictions"], r_mp, atol=1e-5)
    assert jnp.allclose(out["loss"], r_loss, atol=1e-4)

    print("KERNEL_OK")
</pallas_src>

<mosaic_0001>
module attributes {stable_mosaic.version = 11 : i64} {
  func.func @kernel(%arg0: i32, %arg1: memref<8x32xbf16, #tpu.memory_space<vmem>>, %arg2: memref<32x128xbf16, #tpu.memory_space<vmem>>, %arg3: memref<1x128xf32, #tpu.memory_space<vmem>>, %arg4: memref<8x128xf32, #tpu.memory_space<vmem>>, %arg5: memref<8x128xf32, #tpu.memory_space<vmem>>, %arg6: memref<1x8x128xf32, #tpu.memory_space<vmem>>) attributes {dimension_semantics = [#tpu.dimension_semantics<parallel>], iteration_bounds = array<i64: 1>, scalar_prefetch = 0 : i64, scratch_operands = 0 : i64, tpu.core_type = #tpu.core_type<tc>, window_params = [{transform_indices = @transform_0, window_bounds = array<i64: 8, 32>}, {pipeline_mode = #tpu.pipeline_mode<synchronous>, transform_indices = @transform_1, window_bounds = array<i64: 32, 128>}, {pipeline_mode = #tpu.pipeline_mode<synchronous>, transform_indices = @transform_2, window_bounds = array<i64: 1, 128>}, {transform_indices = @transform_3, window_bounds = array<i64: 8, 128>}, {transform_indices = @transform_4, window_bounds = array<i64: 8, 128>}, {transform_indices = @transform_5, window_bounds = array<i64: 1, 8, 128>}]} {
    %c0 = arith.constant 0 : index
    %c0_0 = arith.constant 0 : index
    %0 = vector.load %arg1[%c0, %c0_0] : memref<8x32xbf16, #tpu.memory_space<vmem>>, vector<8x32xbf16>
    %c0_1 = arith.constant 0 : index
    %c0_2 = arith.constant 0 : index
    %1 = vector.load %arg2[%c0_1, %c0_2] : memref<32x128xbf16, #tpu.memory_space<vmem>>, vector<32x128xbf16>
    %cst = arith.constant dense<0.000000e+00> : vector<8x128xf32>
    %2 = tpu.matmul %0, %1, %cst {dimension_numbers = #tpu.dot_dimension_numbers<[1], [0], [0], [1], [0, 0, 1, 1], [], []>} : vector<8x32xbf16>, vector<32x128xbf16>, vector<8x128xf32> -> vector<8x128xf32>
    %c0_3 = arith.constant 0 : index
    %c0_4 = arith.constant 0 : index
    %3 = vector.load %arg3[%c0_3, %c0_4] : memref<1x128xf32, #tpu.memory_space<vmem>>, vector<1x128xf32>
    %4 = vector.broadcast %3 : vector<1x128xf32> to vector<8x128xf32>
    %5 = arith.addf %2, %4 : vector<8x128xf32>
    %c0_5 = arith.constant 0 : index
    %c0_6 = arith.constant 0 : index
    %6 = vector.load %arg5[%c0_5, %c0_6] : memref<8x128xf32, #tpu.memory_space<vmem>>, vector<8x128xf32>
    tpu.vector_store %arg5[%c0_5, %c0_6], %5 {strides = array<i32>} : memref<8x128xf32, #tpu.memory_space<vmem>>, vector<8x128xf32>,
    %c0_7 = arith.constant 0 : index
    %c0_8 = arith.constant 0 : index
    %7 = vector.load %arg4[%c0_7, %c0_8] : memref<8x128xf32, #tpu.memory_space<vmem>>, vector<8x128xf32>
    %8 = tpu.iota {dimensions = array<i32: 1>} : vector<8x128xi32>
    %c8_i32 = arith.constant 8 : i32
    %9 = arith.muli %arg0, %c8_i32 : i32
    %10 = tpu.iota {dimensions = array<i32: 0>} : vector<8x1xi32>
    %11 = vector.broadcast %9 : i32 to vector<8x1xi32>
    %12 = arith.addi %11, %10 : vector<8x1xi32>
    %c2_i32 = arith.constant 2 : i32
    %13 = vector.broadcast %c2_i32 : i32 to vector<8x1xi32>
    %14 = arith.cmpi slt, %12, %13 : vector<8x1xi32>
    %c8_i32_9 = arith.constant 8 : i32
    %15 = vector.broadcast %c8_i32_9 : i32 to vector<8x128xi32>
    %16 = arith.cmpi slt, %8, %15 : vector<8x128xi32>
    %c8_i32_10 = arith.constant 8 : i32
    %17 = vector.broadcast %c8_i32_10 : i32 to vector<8x128xi32>
    %18 = arith.cmpi sge, %8, %17 : vector<8x128xi32>
    %c10_i32 = arith.constant 10 : i32
    %19 = vector.broadcast %c10_i32 : i32 to vector<8x128xi32>
    %20 = arith.cmpi slt, %8, %19 : vector<8x128xi32>
    %21 = arith.andi %18, %20 : vector<8x128xi1>
    %c10_i32_11 = arith.constant 10 : i32
    %22 = vector.broadcast %c10_i32_11 : i32 to vector<8x128xi32>
    %23 = arith.cmpi sge, %8, %22 : vector<8x128xi32>
    %c20_i32 = arith.constant 20 : i32
    %24 = vector.broadcast %c20_i32 : i32 to vector<8x128xi32>
    %25 = arith.cmpi slt, %8, %24 : vector<8x128xi32>
    %26 = arith.andi %23, %25 : vector<8x128xi1>
    %cst_12 = arith.constant 0xFF800000 : f32
    %27 = vector.broadcast %cst_12 : f32 to vector<8x128xf32>
    %28 = arith.select %16, %5, %27 : vector<8x128xi1>, vector<8x128xf32>
    %cst_13 = arith.constant dense<0xFF800000> : vector<8xf32>
    %29 = vector.multi_reduction <maximumf>, %28, %cst_13 [1] : vector<8x128xf32> to vector<8xf32>
    %30 = vector.shape_cast %29 : vector<8xf32> to vector<8x1xf32>
    %31 = vector.broadcast %30 : vector<8x1xf32> to vector<8x128xf32>
    %32 = arith.subf %28, %31 : vector<8x128xf32>
    %33 = math.exp %32 : vector<8x128xf32>
    %cst_14 = arith.constant dense<0.000000e+00> : vector<8xf32>
    %34 = vector.multi_reduction <add>, %33, %cst_14 [1] : vector<8x128xf32> to vector<8xf32>
    %35 = vector.shape_cast %34 : vector<8xf32> to vector<8x1xf32>
    %36 = math.log %35 : vector<8x1xf32>
    %37 = arith.addf %30, %36 : vector<8x1xf32>
    %38 = arith.mulf %5, %7 : vector<8x128xf32>
    %cst_15 = arith.constant 0.000000e+00 : f32
    %39 = vector.broadcast %cst_15 : f32 to vector<8x128xf32>
    %40 = arith.select %16, %38, %39 : vector<8x128xi1>, vector<8x128xf32>
    %cst_16 = arith.constant dense<0.000000e+00> : vector<8xf32>
    %41 = vector.multi_reduction <add>, %40, %cst_16 [1] : vector<8x128xf32> to vector<8xf32>
    %42 = vector.shape_cast %41 : vector<8xf32> to vector<8x1xf32>
    %43 = arith.subf %37, %42 : vector<8x1xf32>
    %cst_17 = arith.constant 0.000000e+00 : f32
    %44 = vector.broadcast %cst_17 : f32 to vector<8x1xf32>
    %45 = arith.select %14, %43, %44 : vector<8x1xi1>, vector<8x1xf32>
    %cst_18 = arith.constant 0xFF800000 : f32
    %46 = vector.broadcast %cst_18 : f32 to vector<8x128xf32>
    %47 = arith.select %21, %5, %46 : vector<8x128xi1>, vector<8x128xf32>
    %cst_19 = arith.constant dense<0xFF800000> : vector<8xf32>
    %48 = vector.multi_reduction <maximumf>, %47, %cst_19 [1] : vector<8x128xf32> to vector<8xf32>
    %49 = vector.shape_cast %48 : vector<8xf32> to vector<8x1xf32>
    %50 = vector.broadcast %49 : vector<8x1xf32> to vector<8x128xf32>
    %51 = arith.subf %47, %50 : vector<8x128xf32>
    %52 = math.exp %51 : vector<8x128xf32>
    %cst_20 = arith.constant dense<0.000000e+00> : vector<8xf32>
    %53 = vector.multi_reduction <add>, %52, %cst_20 [1] : vector<8x128xf32> to vector<8xf32>
    %54 = vector.shape_cast %53 : vector<8xf32> to vector<8x1xf32>
    %55 = math.log %54 : vector<8x1xf32>
    %56 = arith.addf %49, %55 : vector<8x1xf32>
    %57 = arith.mulf %5, %7 : vector<8x128xf32>
    %cst_21 = arith.constant 0.000000e+00 : f32
    %58 = vector.broadcast %cst_21 : f32 to vector<8x128xf32>
    %59 = arith.select %21, %57, %58 : vector<8x128xi1>, vector<8x128xf32>
    %cst_22 = arith.constant dense<0.000000e+00> : vector<8xf32>
    %60 = vector.multi_reduction <add>, %59, %cst_22 [1] : vector<8x128xf32> to vector<8xf32>
    %61 = vector.shape_cast %60 : vector<8xf32> to vector<8x1xf32>
    %62 = arith.subf %56, %61 : vector<8x1xf32>
    %cst_23 = arith.constant 0.000000e+00 : f32
    %63 = vector.broadcast %cst_23 : f32 to vector<8x1xf32>
    %64 = arith.select %14, %62, %63 : vector<8x1xi1>, vector<8x1xf32>
    %65 = arith.subf %5, %7 : vector<8x128xf32>
    %66 = vector.broadcast %14 : vector<8x1xi1> to vector<8x128xi1>
    %67 = arith.andi %66, %26 : vector<8x128xi1>
    %68 = arith.mulf %65, %65 : vector<8x128xf32>
    %cst_24 = arith.constant 0.000000e+00 : f32
    %69 = vector.broadcast %cst_24 : f32 to vector<8x128xf32>
    %70 = arith.select %67, %68, %69 : vector<8x128xi1>, vector<8x128xf32>
    %cst_25 = arith.constant dense<0.000000e+00> : vector<1xf32>
    %71 = vector.multi_reduction <add>, %45, %cst_25 [0] : vector<8x1xf32> to vector<1xf32>
    %72 = vector.shape_cast %71 : vector<1xf32> to vector<1x1xf32>
    %cst_26 = arith.constant dense<0.000000e+00> : vector<1xf32>
    %73 = vector.multi_reduction <add>, %64, %cst_26 [0] : vector<8x1xf32> to vector<1xf32>
    %74 = vector.shape_cast %73 : vector<1xf32> to vector<1x1xf32>
    %cst_27 = arith.constant dense<0.000000e+00> : vector<128xf32>
    %75 = vector.multi_reduction <add>, %70, %cst_27 [0] : vector<8x128xf32> to vector<128xf32>
    %76 = vector.shape_cast %75 : vector<128xf32> to vector<1x128xf32>
    %77 = tpu.iota {dimensions = array<i32: 1>} : vector<1x128xi32>
    %c0_i32 = arith.constant 0 : i32
    %78 = vector.broadcast %c0_i32 : i32 to vector<1x128xi32>
    %79 = arith.cmpi eq, %77, %78 : vector<1x128xi32>
    %c1_i32 = arith.constant 1 : i32
    %80 = vector.broadcast %c1_i32 : i32 to vector<1x128xi32>
    %81 = arith.cmpi eq, %77, %80 : vector<1x128xi32>
    %82 = vector.shape_cast %74 : vector<1x1xf32> to vector<1x1xf32>
    %83 = vector.broadcast %82 : vector<1x1xf32> to vector<1x128xf32>
    %84 = arith.select %81, %83, %76 : vector<1x128xi1>, vector<1x128xf32>
    %85 = vector.shape_cast %72 : vector<1x1xf32> to vector<1x1xf32>
    %86 = vector.broadcast %85 : vector<1x1xf32> to vector<1x128xf32>
    %87 = arith.select %79, %86, %84 : vector<1x128xi1>, vector<1x128xf32>
    %88 = vector.shape_cast %87 : vector<1x128xf32> to vector<1x1x128xf32>
    %89 = vector.shape_cast %88 : vector<1x1x128xf32> to vector<1x1x128xf32>
    %90 = vector.broadcast %89 : vector<1x1x128xf32> to vector<1x8x128xf32>
    %c0_28 = arith.constant 0 : index
    %c0_29 = arith.constant 0 : index
    %c0_30 = arith.constant 0 : index
    %91 = vector.load %arg6[%c0_28, %c0_29, %c0_30] : memref<1x8x128xf32, #tpu.memory_space<vmem>>, vector<1x8x128xf32>
    tpu.vector_store %arg6[%c0_28, %c0_29, %c0_30], %90 {strides = array<i32>} : memref<1x8x128xf32, #tpu.memory_space<vmem>>, vector<1x8x128xf32>,
    return
  }
  func.func @transform_0(%arg0: i32) -> (i32, i32) {
    %c0_i32 = arith.constant 0 : i32
    %c0_i32_0 = arith.constant 0 : i32
    return %arg0, %c0_i32 : i32, i32
  }
  func.func @transform_1(%arg0: i32) -> (i32, i32) {
    %c0_i32 = arith.constant 0 : i32
    %c0_i32_0 = arith.constant 0 : i32
    %c0_i32_1 = arith.constant 0 : i32
    return %c0_i32, %c0_i32_0 : i32, i32
  }
  func.func @transform_2(%arg0: i32) -> (i32, i32) {
    %c0_i32 = arith.constant 0 : i32
    %c0_i32_0 = arith.constant 0 : i32
    %c0_i32_1 = arith.constant 0 : i32
    return %c0_i32, %c0_i32_0 : i32, i32
  }
  func.func @transform_3(%arg0: i32) -> (i32, i32) {
    %c0_i32 = arith.constant 0 : i32
    %c0_i32_0 = arith.constant 0 : i32
    return %arg0, %c0_i32 : i32, i32
  }
  func.func @transform_4(%arg0: i32) -> (i32, i32) {
    %c0_i32 = arith.constant 0 : i32
    %c0_i32_0 = arith.constant 0 : i32
    return %arg0, %c0_i32 : i32, i32
  }
  func.func @transform_5(%arg0: i32) -> (i32, i32, i32) {
    %c0_i32 = arith.constant 0 : i32
    %c0_i32_0 = arith.constant 0 : i32
    %c0_i32_1 = arith.constant 0 : i32
    return %arg0, %c0_i32, %c0_i32_0 : i32, i32, i32
  }
}

</mosaic_0001>

<llo_original>
// kernel: monitoring_model_forward.1
$region0: #{monitoring_model_forward.1}
  #allocation0 [shape = 'u32[]', space=smem, size = 0x4, offset = 0x4, fixed_abs, tag = 'smem constant byte address 0x4 - core index']
  #allocation1 [shape = 'u32[144,128]{1,0:T(1,128)}', space=vmem, size = 0x12000, scoped, tag = 'internal scratch']
  %s0 = inlined_call_operand.vmem [shape: bf16[8,32], index: 0, kind: input, shape index: {}]
  %s1 = inlined_call_operand.vmem [shape: bf16[32,128], index: 1, kind: input, shape index: {}]
  %s2 = inlined_call_operand.vmem [shape: f32[1,128], index: 2, kind: input, shape index: {}]
  %s3 = inlined_call_operand.vmem [shape: f32[8,128], index: 3, kind: input, shape index: {}]
  %s4 = inlined_call_operand.vmem [shape: f32[8,128], index: 4, kind: output, shape index: {0}]
  %s5 = inlined_call_operand.vmem [shape: f32[1,8,128], index: 5, kind: output, shape index: {1}]
  %6 = xla_tuple %s4, %s5
  %s7 = sld [smem:[#allocation0]]
  $region34: #{monitoring_model_forward.1} parent=0
    _
  %s9 = ssub.s32 1, %s7
  %s10 = scalar_select 0, %s9, %s7
  // Predicated region
  $region2: #{monitoring_model_forward.1} parent=0 // pred_check
    _
  $region3: #{monitoring_model_forward.1} parent=0 // pred_check_branch
    %12 = sbr.rel (0) target = $region5
  $region4: #{monitoring_model_forward.1} parent=0 // pred_region
    _
  $region5: #{monitoring_model_forward.1} parent=0 // pred_fallthru
    _
  // Predicated region
  $region6: #{monitoring_model_forward.1} parent=0 // pred_check
    _
  $region7: #{monitoring_model_forward.1} parent=0 // pred_check_branch
    %14 = sbr.rel (0) target = $region9
  $region8: #{monitoring_model_forward.1} parent=0 // pred_region
    _
  $region9: #{monitoring_model_forward.1} parent=0 // pred_fallthru
    _
  // Predicated region
  $region10: #{monitoring_model_forward.1} parent=0 // pred_check
    _
  $region11: #{monitoring_model_forward.1} parent=0 // pred_check_branch
    %16 = sbr.rel (0) target = $region13
  $region12: #{monitoring_model_forward.1} parent=0 // pred_region
    _
  $region13: #{monitoring_model_forward.1} parent=0 // pred_fallthru
    _
  // Predicated region
  $region14: #{monitoring_model_forward.1} parent=0 // pred_check
    _
  $region15: #{monitoring_model_forward.1} parent=0 // pred_check_branch
    %18 = sbr.rel (0) target = $region17
  $region16: #{monitoring_model_forward.1} parent=0 // pred_region
    _
  $region17: #{monitoring_model_forward.1} parent=0 // pred_fallthru
    _
  %v20 = vld [vmem:[%s0] sm:$0xf]
  %v21 = vld [vmem:[%s1] sm:$0xf]
  %v22 = vld [vmem:[%s1 + $0x4] sm:$0xf]
  %v23 = vld [vmem:[%s1 + $0x8] sm:$0xf]
  %v24 = vld [vmem:[%s1 + $0xc] sm:$0xf]
  %v25 = vld [vmem:[%s2] sm:$0x1]
  %v27 = vlaneseq
  %v28 = vshrl.u32 %v27, 7
  %v29 = vsub.s32 0, %v28
  %v30 = vrot.slane %v25, %v29
  %v36 = vunpack.c.l.b16 %v21
  %v37 = vunpack.c.l.b16 %v22
  %v38 = vunpack.c.l.b16 %v23
  %v39 = vunpack.c.l.b16 %v24
  %v40 = vpack.c.b16 %v37, %v36
  %v41 = vpack.c.b16 %v39, %v38
  %vm44 = vcmask 261120
  %v46 = vsel %vm44, %v20, 0
  %48 = vmatprep.subr.bf16.mxu0 0
  %49 = vmatpush1.bf16.msra.mxu0 0
  %50 = vmatprep.subr.bf16.mxu0 0
  %51 = vmatpush1.bf16.msra.mxu0 0
  %52 = vmatprep.subr.bf16.mxu0 0
  %53 = vmatpush1.bf16.msra.mxu0 0
  %54 = vmatprep.subr.bf16.mxu0 0
  %55 = vmatpush1.bf16.msra.mxu0 0
  %56 = vmatprep.subr.bf16.mxu0 0
  %57 = vmatpush1.bf16.msra.mxu0 0
  %58 = vmatprep.subr.bf16.mxu0 0
  %59 = vmatpush1.bf16.msra.mxu0 0
  %60 = vmatprep.subr.bf16.mxu0 0
  %61 = vmatpush1.bf16.msra.mxu0 %v41
  %62 = vmatprep.subr.bf16.mxu0 0
  %63 = vmatpush1.bf16.msra.mxu0 %v40
  %64 = vmatprep.subr.bf16.mxu0 0
  %65 = vmatpush2.bf16.msra.mxu0 0
  %66 = vmatprep.subr.bf16.mxu0 0
  %67 = vmatpush2.bf16.msra.mxu0 0
  %68 = vmatprep.subr.bf16.mxu0 0
  %69 = vmatpush2.bf16.msra.mxu0 0
  %70 = vmatprep.subr.bf16.mxu0 0
  %71 = vmatpush2.bf16.msra.mxu0 0
  %72 = vmatprep.subr.bf16.mxu0 0
  %73 = vmatpush2.bf16.msra.mxu0 0
  %74 = vmatprep.subr.bf16.mxu0 0
  %75 = vmatpush2.bf16.msra.mxu0 0
  %76 = vmatprep.subr.bf16.mxu0 0
  %77 = vmatpush2.bf16.msra.mxu0 0
  %78 = vmatprep.subr.bf16.mxu0 0
  %79 = vmatpush2.bf16.msra.mxu0 0
  %80 = vmatprep.mubr.bf16.mxu0 0
  %81 = vmatmul.mubr.bf16.gmra.mxu0 %v46
  %v82 = vpop.f32.mrf.mxu0
  %v83 = vadd.f32 %v30, %v82
  %v84 = vpop.f32.mrf.mxu0
  %v85 = vpop.f32.mrf.mxu0
  %v86 = vpop.f32.mrf.mxu0
  %87 = vdwg.mxu0
  %88 = vst [vmem:[%s4] sm:$0xff] %v83
  %v89 = vld [vmem:[%s3] sm:$0xff]
  %v90 = vlaneseq
  %v91 = vand.u32 %v90, 127
  %s92 = smul.u32 0, 8
  %v93 = vlaneseq
  %v94 = vshrl.u32 %v93, 7
  %v95 = vstv %s92
  %v96 = vadd.s32 %v95, %v94
  %vm97 = vcmp.lt.s32.totalorder %v96, 2
  %vm98 = vcmp.lt.s32.totalorder %v91, 8
  %vm99 = vcmp.ge.s32.totalorder %v91, 8
  %vm100 = vcmp.lt.s32.totalorder %v91, 10
  %vm101 = vmand %vm99, %vm100
  %vm102 = vcmp.ge.s32.totalorder %v91, 10
  %vm103 = vcmp.lt.s32.totalorder %v91, 20
  %vm104 = vmand %vm102, %vm103
  %v105 = vsel %vm98, %v83, -inf
  %106 = vmax.xlane.f32.xlu0 %v105
  %v107 = vpop.xlane.xlu0 %106
  %v108 = vsub.f32 %v105, %v107
  %v109 = vmul.f32 %v108, 1.442695
  %v110 = vpow.pop %v109
  %111 = vadd.xlane.f32.xlu0 %v110
  %v112 = vpop.xlane.xlu0 %111
  %v113 = vlog2.pop %v112
  %v114 = vmul.f32 %v113, 0.6931472
  %v115 = vadd.f32 %v107, %v114
  %v116 = vmul.f32 %v83, %v89
  %v117 = vsel %vm98, %v116, 0.0
  %118 = vadd.xlane.f32.xlu0 %v117
  %v119 = vpop.xlane.xlu0 %118
  %v120 = vsub.f32 %v115, %v119
  %v121 = vsel %vm97, %v120, 0.0
  %v122 = vsel %vm101, %v83, -inf
  %123 = vmax.xlane.f32.xlu0 %v122
  %v124 = vpop.xlane.xlu0 %123
  %v125 = vsub.f32 %v122, %v124
  %v126 = vmul.f32 %v125, 1.442695
  %v127 = vpow.pop %v126
  %128 = vadd.xlane.f32.xlu0 %v127
  %v129 = vpop.xlane.xlu0 %128
  %v130 = vlog2.pop %v129
  %v131 = vmul.f32 %v130, 0.6931472
  %v132 = vadd.f32 %v124, %v131
  %v133 = vsel %vm101, %v116, 0.0
  %134 = vadd.xlane.f32.xlu0 %v133
  %v135 = vpop.xlane.xlu0 %134
  %v136 = vsub.f32 %v132, %v135
  %v137 = vsel %vm97, %v136, 0.0
  %v138 = vsub.f32 %v83, %v89
  %v139 = vsel %vm97, 1, 0
  %vm140 = vcmp.eq.s32.totalorder %v139, 1
  %vm141 = vmand %vm140, %vm104
  %v142 = vmul.f32 %v138, %v138
  %v143 = vsel %vm141, %v142, 0.0
  %v144 = vrot.slane %v121, 4
  %v145 = vadd.f32 %v121, %v144
  %v146 = vrot.slane %v145, 2
  %v147 = vadd.f32 %v145, %v146
  %v148 = vrot.slane %v147, 1
  %v149 = vadd.f32 %v147, %v148
  %v150 = vrot.slane %v137, 4
  %v151 = vadd.f32 %v137, %v150
  %v152 = vrot.slane %v151, 2
  %v153 = vadd.f32 %v151, %v152
  %v154 = vrot.slane %v153, 1
  %v155 = vadd.f32 %v153, %v154
  %v156 = vrot.slane %v143, 4
  %v157 = vadd.f32 %v143, %v156
  %v158 = vrot.slane %v157, 2
  %v159 = vadd.f32 %v157, %v158
  %v160 = vrot.slane %v159, 1
  %v161 = vadd.f32 %v159, %v160
  %vm162 = vcmp.eq.s32.totalorder %v91, 0
  %vm163 = vcmp.eq.s32.totalorder %v91, 1
  %v164 = vsel %vm163, %v155, %v161
  %v165 = vsel %vm162, %v149, %v164
  %166 = vst [vmem:[%s5] sm:$0xff] %v165
  // Predicated region
  $region18: #{monitoring_model_forward.1} parent=0 // pred_check
    _
  $region19: #{monitoring_model_forward.1} parent=0 // pred_check_branch
    %168 = sbr.rel (0) target = $region21
  $region20: #{monitoring_model_forward.1} parent=0 // pred_region
    _
  $region21: #{monitoring_model_forward.1} parent=0 // pred_fallthru
    _
  // Predicated region
  $region22: #{monitoring_model_forward.1} parent=0 // pred_check
    _
  $region23: #{monitoring_model_forward.1} parent=0 // pred_check_branch
    %170 = sbr.rel (0) target = $region25
  $region24: #{monitoring_model_forward.1} parent=0 // pred_region
    _
  $region25: #{monitoring_model_forward.1} parent=0 // pred_fallthru
    _
  // Predicated region
  $region26: #{monitoring_model_forward.1} parent=0 // pred_check
    _
  $region27: #{monitoring_model_forward.1} parent=0 // pred_check_branch
    %172 = sbr.rel (0) target = $region29
  $region28: #{monitoring_model_forward.1} parent=0 // pred_region
    _
  $region29: #{monitoring_model_forward.1} parent=0 // pred_fallthru
    _
  // Predicated region
  $region30: #{monitoring_model_forward.1} parent=0 // pred_check
    _
  $region31: #{monitoring_model_forward.1} parent=0 // pred_check_branch
    %174 = sbr.rel (0) target = $region33
  $region32: #{monitoring_model_forward.1} parent=0 // pred_region
    _
  $region33: #{monitoring_model_forward.1} parent=0 // pred_fallthru
    _

</llo_original>
